<compile_context>
chip_gen: v7x
topology: tpu7x:2x2x1
jax: 0.10.0
libtpu: 0.0.40
codegen_flags: <defaults>
</compile_context>

<pallas_src>
import functools

import jax
import jax.numpy as jnp
from jax.experimental import pallas as pl
from jax.experimental.pallas import tpu as pltpu

_LANES = 1024        # lane-dense last dim (large multiple of 128)
_BLOCK_ROWS = 512    # 512 x 1024 f32 tile = 2 MiB; fits v7x scoped VMEM easily


def _soft_threshold_kernel(x_ref, o_ref, *, thr: float):
    # x_ref / o_ref: VMEM tiles of shape (TR, _LANES). Compute in f32.
    x = x_ref[...].astype(jnp.float32)
    a = jnp.sqrt((x - thr) * (x - thr) + 1.0)
    b = jnp.sqrt((x + thr) * (x + thr) + 1.0)
    o_ref[...] = (x + 0.5 * (a - b)).astype(o_ref.dtype)


def soft_threshold(x: jax.Array, thr_lambda: float = 0.5) -> jax.Array:
    """Pallas implementation of SoftThreshold.forward. Works for any shape."""
    orig_shape = x.shape
    orig_dtype = x.dtype
    total = x.size

    # Flatten to a lane-dense (rows, _LANES) slab, padding so the grid tiles
    # exactly (padding is elementwise-inert; we slice it off afterwards).
    cols = _LANES
    rows = -(-total // cols)                       # ceil-div
    tr = min(_BLOCK_ROWS, rows)                    # block rows (== full extent
                                                   # when rows < 512, else 512,
                                                   # which is a multiple of 8)
    padded_rows = -(-rows // tr) * tr
    padded_total = padded_rows * cols

    flat = x.reshape(-1)
    if padded_total != total:
        flat = jnp.pad(flat, (0, padded_total - total))
    x2d = flat.reshape(padded_rows, cols)

    grid = (padded_rows // tr,)
    kernel = functools.partial(_soft_threshold_kernel, thr=float(thr_lambda))

    out2d = pl.pallas_call(
        kernel,
        out_shape=jax.ShapeDtypeStruct(x2d.shape, orig_dtype),
        grid_spec=pl.GridSpec(
            grid=grid,
            in_specs=[pl.BlockSpec((tr, cols), lambda i: (i, 0))],
            out_specs=pl.BlockSpec((tr, cols), lambda i: (i, 0)),
        ),
        compiler_params=pltpu.CompilerParams(
            dimension_semantics=("parallel",),
        ),
    )(x2d)

    return out2d.reshape(-1)[:total].reshape(orig_shape)


def _reference(x, thr_lambda=0.5):
    xf = x.astype(jnp.float32)
    out = xf + 0.5 * (
        jnp.sqrt((xf - thr_lambda) ** 2 + 1.0)
        - jnp.sqrt((xf + thr_lambda) ** 2 + 1.0)
    )
    return out.astype(x.dtype)


if __name__ == "__main__":
    key = jax.random.PRNGKey(0)
    # NCHW, small shapes: batch=2, channels=4, spatial=16x16
    x = jax.random.normal(key, (2, 4, 16, 16), dtype=jnp.float32)

    out = soft_threshold(x, thr_lambda=0.5)
    out = jax.block_until_ready(out)

    ref = _reference(x, 0.5)
    assert out.shape == x.shape and out.dtype == x.dtype
    assert jnp.allclose(out, ref, atol=1e-5, rtol=1e-5)

    print("KERNEL_OK")
</pallas_src>

<mosaic_0001>
module attributes {stable_mosaic.version = 11 : i64} {
  func.func @_soft_threshold_kernel(%arg0: i32, %arg1: memref<2x1024xf32, #tpu.memory_space<vmem>>, %arg2: memref<2x1024xf32, #tpu.memory_space<vmem>>) attributes {dimension_semantics = [#tpu.dimension_semantics<parallel>], iteration_bounds = array<i64: 1>, scalar_prefetch = 0 : i64, scratch_operands = 0 : i64, tpu.core_type = #tpu.core_type<tc>, window_params = [{transform_indices = @transform_0, window_bounds = array<i64: 2, 1024>}, {transform_indices = @transform_1, window_bounds = array<i64: 2, 1024>}]} {
    %c0 = arith.constant 0 : index
    %c0_0 = arith.constant 0 : index
    %0 = vector.load %arg1[%c0, %c0_0] : memref<2x1024xf32, #tpu.memory_space<vmem>>, vector<2x1024xf32>
    %cst = arith.constant 5.000000e-01 : f32
    %1 = vector.broadcast %cst : f32 to vector<2x1024xf32>
    %2 = arith.subf %0, %1 : vector<2x1024xf32>
    %cst_1 = arith.constant 5.000000e-01 : f32
    %3 = vector.broadcast %cst_1 : f32 to vector<2x1024xf32>
    %4 = arith.subf %0, %3 : vector<2x1024xf32>
    %5 = arith.mulf %2, %4 : vector<2x1024xf32>
    %cst_2 = arith.constant 1.000000e+00 : f32
    %6 = vector.broadcast %cst_2 : f32 to vector<2x1024xf32>
    %7 = arith.addf %5, %6 : vector<2x1024xf32>
    %8 = math.sqrt %7 : vector<2x1024xf32>
    %cst_3 = arith.constant 5.000000e-01 : f32
    %9 = vector.broadcast %cst_3 : f32 to vector<2x1024xf32>
    %10 = arith.addf %0, %9 : vector<2x1024xf32>
    %cst_4 = arith.constant 5.000000e-01 : f32
    %11 = vector.broadcast %cst_4 : f32 to vector<2x1024xf32>
    %12 = arith.addf %0, %11 : vector<2x1024xf32>
    %13 = arith.mulf %10, %12 : vector<2x1024xf32>
    %cst_5 = arith.constant 1.000000e+00 : f32
    %14 = vector.broadcast %cst_5 : f32 to vector<2x1024xf32>
    %15 = arith.addf %13, %14 : vector<2x1024xf32>
    %16 = math.sqrt %15 : vector<2x1024xf32>
    %17 = arith.subf %8, %16 : vector<2x1024xf32>
    %cst_6 = arith.constant 5.000000e-01 : f32
    %18 = vector.broadcast %cst_6 : f32 to vector<2x1024xf32>
    %19 = arith.mulf %18, %17 : vector<2x1024xf32>
    %20 = arith.addf %0, %19 : vector<2x1024xf32>
    %c0_7 = arith.constant 0 : index
    %c0_8 = arith.constant 0 : index
    %21 = vector.load %arg2[%c0_7, %c0_8] : memref<2x1024xf32, #tpu.memory_space<vmem>>, vector<2x1024xf32>
    tpu.vector_store %arg2[%c0_7, %c0_8], %20 {strides = array<i32>} : memref<2x1024xf32, #tpu.memory_space<vmem>>, vector<2x1024xf32>,
    return
  }
  func.func @transform_0(%arg0: i32) -> (i32, i32) {
    %c0_i32 = arith.constant 0 : i32
    %c0_i32_0 = arith.constant 0 : i32
    return %arg0, %c0_i32 : i32, i32
  }
  func.func @transform_1(%arg0: i32) -> (i32, i32) {
    %c0_i32 = arith.constant 0 : i32
    %c0_i32_0 = arith.constant 0 : i32
    return %arg0, %c0_i32 : i32, i32
  }
}

</mosaic_0001>

<llo_original>
// kernel: tpu_custom_call.1
$region0: #{tpu_custom_call.1}
  #allocation0 [shape = 'u32[]', space=smem, size = 0x4, offset = 0x4, fixed_abs, tag = 'smem constant byte address 0x4 - core index']
  #allocation1 [shape = 'u32[144,128]{1,0:T(1,128)}', space=vmem, size = 0x12000, scoped, tag = 'internal scratch']
  %s0 = inlined_call_operand.hbm [shape: f32[2,1024], index: 0, kind: input, shape index: {}]
  %s1 = inlined_call_operand.hbm [shape: f32[2,1024], index: 1, kind: output, shape index: {}]
  %s2 = sld [smem:[#allocation0]]
  $region18: #{tpu_custom_call.1} parent=0
    _
  %s4 = ssub.s32 1, %s2
  %s5 = scalar_select 0, %s4, %s2
  $region1: #{tpu_custom_call.1} parent=0
    #allocation2 [shape = 'u8[8192]{0}', space=vmem, size = 0x2000, scoped, tag = 'input window, operand 0, single buffered']
    #allocation3 [shape = 's32[1]{0}', space=sflag, size = 0x4, scoped, tag = 'scoped memory for tpu_custom_call.1']
    #allocation4 [shape = 's32[1]{0}', space=sflag, size = 0x4, scoped, tag = 'scoped memory for tpu_custom_call.1']
    #allocation5 [shape = 'u8[8192]{0}', space=vmem, size = 0x2000, scoped, tag = 'output window, operand 0, single buffered']
    %6 = vsyncpa [#allocation3], 0
    %7 = vsyncpa [#allocation4], 0
    // Predicated region
    $region2: #{tpu_custom_call.1} parent=1 // pred_check
      _
    $region3: #{tpu_custom_call.1} parent=1 // pred_check_branch
      %9 = sbr.rel (0) target = $region5
    $region4: #{tpu_custom_call.1} parent=1 // pred_region
      %s11 = ssub.s32 256, 256
      %12 = vsyncadd [#allocation3], %s11
      %s14 = sshll.u32 [#allocation2], 4
      %s15 = int_to_ptr.vmem [resolvable:$true] %s14
      %17 = dma.hbm_to_vmem [thread:$0]  %s0, 256, %s15, [#allocation3]
    $region5: #{tpu_custom_call.1} parent=1 // pred_fallthru
      _
    // Predicated region
    $region6: #{tpu_custom_call.1} parent=1 // pred_check
      _
    $region7: #{tpu_custom_call.1} parent=1 // pred_check_branch
      %19 = sbr.rel (0) target = $region9
    $region8: #{tpu_custom_call.1} parent=1 // pred_region
      %20 = dma.done [#allocation3], 256
    $region9: #{tpu_custom_call.1} parent=1 // pred_fallthru
      _
    %v21 = vld [vmem:[#allocation2] sm:$0xff]
    %v22 = vld [vmem:[#allocation2 + $0x8] sm:$0xff]
    %v23 = vsub.f32 %v21, 0.5
    %v24 = vsub.f32 %v22, 0.5
    %v25 = vmul.f32 %v23, %v23
    %v26 = vmul.f32 %v24, %v24
    %v27 = vadd.f32 %v25, 1.0
    %v28 = vadd.f32 %v26, 1.0
    %v29 = vrsqrt.pop %v27
    %v30 = vmul.f32 %v27, %v29
    %vm31 = vcmp.eq.f32.partialorder %v27, inf
    %v32 = vsel %vm31, %v27, %v30
    %vm33 = vcmp.eq.f32.partialorder %v27, 0.0
    %v34 = vand.u32 %v27, 2147483648
    %v35 = vsel %vm33, %v34, %v32
    %v36 = vrsqrt.pop %v28
    %v37 = vmul.f32 %v28, %v36
    %vm38 = vcmp.eq.f32.partialorder %v28, inf
    %v39 = vsel %vm38, %v28, %v37
    %vm40 = vcmp.eq.f32.partialorder %v28, 0.0
    %v41 = vand.u32 %v28, 2147483648
    %v42 = vsel %vm40, %v41, %v39
    %v43 = vadd.f32 %v21, 0.5
    %v44 = vadd.f32 %v22, 0.5
    %v45 = vmul.f32 %v43, %v43
    %v46 = vmul.f32 %v44, %v44
    %v47 = vadd.f32 %v45, 1.0
    %v48 = vadd.f32 %v46, 1.0
    %v49 = vrsqrt.pop %v47
    %v50 = vmul.f32 %v47, %v49
    %vm51 = vcmp.eq.f32.partialorder %v47, inf
    %v52 = vsel %vm51, %v47, %v50
    %vm53 = vcmp.eq.f32.partialorder %v47, 0.0
    %v54 = vand.u32 %v47, 2147483648
    %v55 = vsel %vm53, %v54, %v52
    %v56 = vrsqrt.pop %v48
    %v57 = vmul.f32 %v48, %v56
    %vm58 = vcmp.eq.f32.partialorder %v48, inf
    %v59 = vsel %vm58, %v48, %v57
    %vm60 = vcmp.eq.f32.partialorder %v48, 0.0
    %v61 = vand.u32 %v48, 2147483648
    %v62 = vsel %vm60, %v61, %v59
    %v63 = vsub.f32 %v35, %v55
    %v64 = vsub.f32 %v42, %v62
    %v65 = vmul.f32 %v63, 0.5
    %v66 = vmul.f32 %v64, 0.5
    %v67 = vadd.f32 %v21, %v65
    %v68 = vadd.f32 %v22, %v66
    %69 = vst [vmem:[#allocation5] sm:$0xff] %v67
    %70 = vst [vmem:[#allocation5 + $0x8] sm:$0xff] %v68
    // Predicated region
    $region10: #{tpu_custom_call.1} parent=1 // pred_check
      _
    $region11: #{tpu_custom_call.1} parent=1 // pred_check_branch
      %72 = sbr.rel (0) target = $region13
    $region12: #{tpu_custom_call.1} parent=1 // pred_region
      %s74 = ssub.s32 256, 256
      %75 = vsyncadd [#allocation4], %s74
      %s77 = sshll.u32 [#allocation5], 4
      %s78 = int_to_ptr.vmem [resolvable:$true] %s77
      %80 = dma.vmem_to_hbm [thread:$0]  %s78, 256, %s1, [#allocation4]
    $region13: #{tpu_custom_call.1} parent=1 // pred_fallthru
      _
    // Predicated region
    $region14: #{tpu_custom_call.1} parent=1 // pred_check
      _
    $region15: #{tpu_custom_call.1} parent=1 // pred_check_branch
      %82 = sbr.rel (0) target = $region17
    $region16: #{tpu_custom_call.1} parent=1 // pred_region
      %83 = dma.done [#allocation4], 256
    $region17: #{tpu_custom_call.1} parent=1 // pred_fallthru
      _
    %84 = vsyncpa [#allocation3], 1
    %85 = vsyncpa [#allocation4], 1

</llo_original>
